<compile_context>
chip_gen: v5e
topology: v5e:2x2
jax: 0.10.0
libtpu: 0.0.40
codegen_flags: <defaults>
</compile_context>

<pallas_src>
from typing import NamedTuple

import jax
import jax.numpy as jnp
from jax.experimental import pallas as pl
from jax.experimental.pallas import tpu as pltpu

D_HID = 512
D_OUT = 49


def _round_up(x, m):
    return ((x + m - 1) // m) * m


def _pipeline_mode_supported():
    """True iff this jax build supports pl.BlockSpec(..., pipeline_mode=pl.Buffered(k))."""
    if not hasattr(pl, "Buffered"):
        return False
    try:
        pl.BlockSpec((8, 128), lambda i: (0, 0), pipeline_mode=pl.Buffered(1))
        return True
    except TypeError:
        return False


_PIPELINE_MODE_SUPPORTED = _pipeline_mode_supported()


def _mlp_kernel(x_ref, w1_ref, b1_ref, w2_ref, b2_ref, o_ref):
    # x_ref : (TB, Din)    f32  -> cast to bf16 in-register (avoids a separate HBM
    #                             convert pass over the activations in the wrapper)
    # w1_ref: (Din, 512)   bf16   b1_ref: (1, 512)    f32
    # w2_ref: (512, Doutp) bf16   b2_ref: (1, Doutp)  f32
    # o_ref : (TB, Doutp)  f32 or bf16 (f32 accumulate either way)
    x = x_ref[...].astype(jnp.bfloat16)
    h = jnp.dot(x, w1_ref[...], preferred_element_type=jnp.float32)
    # bias + ReLU in f32, fused with the bf16 downcast: second matmul's LHS is bf16.
    h = jnp.maximum(h + b1_ref[...], 0.0).astype(jnp.bfloat16)
    out = jnp.dot(h, w2_ref[...], preferred_element_type=jnp.float32)
    o_ref[...] = (out + b2_ref[...]).astype(o_ref.dtype)


class DenseMapNetParams(NamedTuple):
    w1: jax.Array  # (d_in, d_hid)    bf16
    b1: jax.Array  # (1, d_hid)       f32
    w2: jax.Array  # (d_hid, d_out_p) bf16, zero-padded to a 128-lane multiple
    b2: jax.Array  # (1, d_out_p)     f32,  zero-padded


def prepare_params(w1, b1, w2, b2) -> DenseMapNetParams:
    """One-time weight prep (bf16 cast + lane padding) -- hoisted out of the forward."""
    d_in, d_hid = w1.shape
    d_out = w2.shape[1]
    d_out_p = _round_up(d_out, 128)
    w1_p = w1.astype(jnp.bfloat16)
    b1_p = b1.astype(jnp.float32).reshape(1, d_hid)
    w2_p = jnp.zeros((d_hid, d_out_p), jnp.bfloat16).at[:, :d_out].set(
        w2.astype(jnp.bfloat16))
    b2_p = jnp.zeros((1, d_out_p), jnp.float32).at[0, :d_out].set(
        b2.astype(jnp.float32))
    return DenseMapNetParams(w1_p, b1_p, w2_p, b2_p)


def _pick_tile_b(B, tile_b):
    tile_b = _round_up(max(tile_b, 128), 128)
    b128 = _round_up(B, 128)
    tile_b = min(tile_b, b128)
    # Keep >= 2 grid steps when there is enough work so the "parallel" batch axis can
    # shard across both v7x TensorCores.
    if b128 >= 256:
        tile_b = min(tile_b, max(128, _round_up(pl.cdiv(B, 2), 128)))
    # Tiny batches: shrink to the 8-row sublane granule instead of padding to 128.
    return min(tile_b, _round_up(B, 8))


def dense_map_net_apply(x, params, *, d_out=D_OUT, tile_b=2048,
                        out_dtype=jnp.float32, trim_output=True,
                        single_buffer_weights=None):
    """relu(x @ w1 + b1) @ w2 + b2 on pre-prepared params.  x: (B, d_in) float32."""
    B, d_in = x.shape
    w1_p, b1_p, w2_p, b2_p = params
    assert w1_p.shape[0] == d_in, (w1_p.shape, d_in)
    d_hid = w1_p.shape[1]
    d_out_p = w2_p.shape[1]
    assert d_out <= d_out_p

    tile_b = _pick_tile_b(B, tile_b)
    num_tiles = pl.cdiv(B, tile_b)

    if single_buffer_weights is None:
        single_buffer_weights = _PIPELINE_MODE_SUPPORTED

    def _const_spec(shape):
        # Grid-invariant operands (weights/biases, constant index_map): single-buffer
        # when supported. This is NOT a big lever (weights are ~160 KB); default
        # double-buffering is a fine fallback.
        index_map = lambda i: (0, 0)
        if single_buffer_weights:
            return pl.BlockSpec(shape, index_map, pipeline_mode=pl.Buffered(1))
        return pl.BlockSpec(shape, index_map)

    in_specs = [
        pl.BlockSpec((tile_b, d_in), lambda i: (i, 0)),  # x tile (streamed, native f32)
        _const_spec((d_in, d_hid)),                      # W1 (resident)
        _const_spec((1, d_hid)),                         # b1
        _const_spec((d_hid, d_out_p)),                   # W2 (resident)
        _const_spec((1, d_out_p)),                       # b2
    ]
    # Lane-dense (128-multiple) output => full-width unmasked stores.
    out_specs = pl.BlockSpec((tile_b, d_out_p), lambda i: (i, 0))

    out_itemsize = jnp.dtype(out_dtype).itemsize
    # Explicit VMEM budget: 2x computed need, capped at v7x's 64 MiB physical VMEM.
    vmem_needed = (
        2 * tile_b * d_in * x.dtype.itemsize        # x tiles (double-buffered)
        + 2 * (d_in * d_hid + d_hid * d_out_p) * 2  # weights (x2 if double-buffered)
        + 2 * (d_hid + d_out_p) * 4                 # biases
        + 2 * tile_b * d_out_p * out_itemsize       # out tiles (double-buffered)
        + tile_b * d_hid * (4 + 2)                  # hidden activation (f32 acc + bf16)
    )
    vmem_limit = int(min(64 * 1024 * 1024, max(4 * 1024 * 1024, 2 * vmem_needed)))

    flops = 2 * B * (d_in * d_hid + d_hid * d_out_p)
    bytes_accessed = (x.size * x.dtype.itemsize
                      + (d_in * d_hid + d_hid * d_out_p) * 2
                      + (d_hid + d_out_p) * 4
                      + B * d_out_p * out_itemsize)
    cost = pl.CostEstimate(flops=flops, transcendentals=0,
                           bytes_accessed=bytes_accessed)

    out_p = pl.pallas_call(
        _mlp_kernel,
        out_shape=jax.ShapeDtypeStruct((B, d_out_p), out_dtype),
        grid_spec=pltpu.PrefetchScalarGridSpec(
            num_scalar_prefetch=0,
            grid=(num_tiles,),
            in_specs=in_specs,
            out_specs=out_specs,
        ),
        compiler_params=pltpu.CompilerParams(
            dimension_semantics=("parallel",),
            vmem_limit_bytes=vmem_limit,
        ),
        cost_estimate=cost,
    )(x, w1_p, b1_p, w2_p, b2_p)

    if not trim_output:
        # Consumers running under jit can slice the 49 valid columns lazily / fuse
        # downstream and skip this extra HBM pass over the output.
        return out_p
    return out_p[:, :d_out]


def dense_map_net(x, w1, b1, w2, b2, *, tile_b=2048, out_dtype=jnp.float32):
    """Convenience wrapper matching the PyTorch module's forward; returns (B, 49).

    For repeated calls, hoist prepare_params() out of the loop and call / jit
    dense_map_net_apply directly (params are a pytree; the rest is static).
    """
    params = prepare_params(w1, b1, w2, b2)
    d_out = w2.shape[1]
    try:
        return dense_map_net_apply(x, params, d_out=d_out, tile_b=tile_b,
                                   out_dtype=out_dtype)
    except Exception as e:
        # Narrow retry: only if pipeline_mode=pl.Buffered(1) was rejected at lowering.
        msg = str(e).lower()
        if (not _PIPELINE_MODE_SUPPORTED) or ("buffer" not in msg and "pipeline" not in msg):
            raise
        return dense_map_net_apply(x, params, d_out=d_out, tile_b=tile_b,
                                   out_dtype=out_dtype, single_buffer_weights=False)


def init_params(key, dim_input, d_hid=D_HID, d_out=D_OUT, dtype=jnp.float32):
    """Deterministic init mimicking nn.Linear's uniform(-1/sqrt(fan_in), 1/sqrt(fan_in))."""
    k1, k2, k3, k4 = jax.random.split(key, 4)
    bound1 = 1.0 / jnp.sqrt(dim_input)
    bound2 = 1.0 / jnp.sqrt(d_hid)
    # Weights stored transposed relative to PyTorch, i.e. (in, out), so kernel does x @ W.
    w1 = jax.random.uniform(k1, (dim_input, d_hid), dtype, -bound1, bound1)
    b1 = jax.random.uniform(k2, (d_hid,), dtype, -bound1, bound1)
    w2 = jax.random.uniform(k3, (d_hid, d_out), dtype, -bound2, bound2)
    b2 = jax.random.uniform(k4, (d_out,), dtype, -bound2, bound2)
    return w1, b1, w2, b2


if __name__ == "__main__":
    key = jax.random.PRNGKey(0)
    kx, kp = jax.random.split(key)

    batch = 8
    dim_input = 32

    x = jax.random.normal(kx, (batch, dim_input), jnp.float32)
    w1, b1, w2, b2 = init_params(kp, dim_input)

    # Module-faithful f32 output path (via the convenience wrapper).
    out = jax.block_until_ready(dense_map_net(x, w1, b1, w2, b2))

    ref = jnp.maximum(x @ w1 + b1, 0.0) @ w2 + b2
    assert out.shape == (batch, D_OUT), out.shape
    assert jnp.allclose(out, ref, atol=5e-2, rtol=5e-2), (
        float(jnp.max(jnp.abs(out - ref))))

    # Hoisted-params + bf16-output path (halves the dominant HBM writeback stream;
    # accumulation / bias add remain f32 inside the kernel).
    params = prepare_params(w1, b1, w2, b2)
    out_bf16 = jax.block_until_ready(
        dense_map_net_apply(x, params, d_out=D_OUT, out_dtype=jnp.bfloat16,
                            single_buffer_weights=False))
    assert out_bf16.shape == (batch, D_OUT), out_bf16.shape
    assert jnp.allclose(out_bf16.astype(jnp.float32), ref, atol=1e-1, rtol=1e-1), (
        float(jnp.max(jnp.abs(out_bf16.astype(jnp.float32) - ref))))

    print("KERNEL_OK")
</pallas_src>

<mosaic_0001>
module attributes {stable_mosaic.version = 11 : i64} {
  func.func @_mlp_kernel(%arg0: i32, %arg1: memref<8x32xf32, #tpu.memory_space<vmem>>, %arg2: memref<32x512xbf16, #tpu.memory_space<vmem>>, %arg3: memref<1x512xf32, #tpu.memory_space<vmem>>, %arg4: memref<512x128xbf16, #tpu.memory_space<vmem>>, %arg5: memref<1x128xf32, #tpu.memory_space<vmem>>, %arg6: memref<8x128xf32, #tpu.memory_space<vmem>>) attributes {dimension_semantics = [#tpu.dimension_semantics<parallel>], iteration_bounds = array<i64: 1>, scalar_prefetch = 0 : i64, scratch_operands = 0 : i64, tpu.core_type = #tpu.core_type<tc>, window_params = [{transform_indices = @transform_0, window_bounds = array<i64: 8, 32>}, {pipeline_mode = #tpu.pipeline_mode<synchronous>, transform_indices = @transform_1, window_bounds = array<i64: 32, 512>}, {pipeline_mode = #tpu.pipeline_mode<synchronous>, transform_indices = @transform_2, window_bounds = array<i64: 1, 512>}, {pipeline_mode = #tpu.pipeline_mode<synchronous>, transform_indices = @transform_3, window_bounds = array<i64: 512, 128>}, {pipeline_mode = #tpu.pipeline_mode<synchronous>, transform_indices = @transform_4, window_bounds = array<i64: 1, 128>}, {transform_indices = @transform_5, window_bounds = array<i64: 8, 128>}]} {
    %c0 = arith.constant 0 : index
    %c0_0 = arith.constant 0 : index
    %0 = vector.load %arg1[%c0, %c0_0] : memref<8x32xf32, #tpu.memory_space<vmem>>, vector<8x32xf32>
    %1 = arith.truncf %0 : vector<8x32xf32> to vector<8x32xbf16>
    %c0_1 = arith.constant 0 : index
    %c0_2 = arith.constant 0 : index
    %2 = vector.load %arg2[%c0_1, %c0_2] : memref<32x512xbf16, #tpu.memory_space<vmem>>, vector<32x512xbf16>
    %cst = arith.constant dense<0.000000e+00> : vector<8x512xf32>
    %3 = tpu.matmul %1, %2, %cst {dimension_numbers = #tpu.dot_dimension_numbers<[1], [0], [0], [1], [0, 0, 1, 1], [], []>} : vector<8x32xbf16>, vector<32x512xbf16>, vector<8x512xf32> -> vector<8x512xf32>
    %c0_3 = arith.constant 0 : index
    %c0_4 = arith.constant 0 : index
    %4 = vector.load %arg3[%c0_3, %c0_4] : memref<1x512xf32, #tpu.memory_space<vmem>>, vector<1x512xf32>
    %5 = vector.broadcast %4 : vector<1x512xf32> to vector<8x512xf32>
    %6 = arith.addf %3, %5 : vector<8x512xf32>
    %cst_5 = arith.constant 0.000000e+00 : f32
    %7 = vector.broadcast %cst_5 : f32 to vector<8x512xf32>
    %8 = arith.maximumf %6, %7 : vector<8x512xf32>
    %9 = arith.truncf %8 : vector<8x512xf32> to vector<8x512xbf16>
    %c0_6 = arith.constant 0 : index
    %c0_7 = arith.constant 0 : index
    %10 = vector.load %arg4[%c0_6, %c0_7] : memref<512x128xbf16, #tpu.memory_space<vmem>>, vector<512x128xbf16>
    %cst_8 = arith.constant dense<0.000000e+00> : vector<8x128xf32>
    %11 = tpu.matmul %9, %10, %cst_8 {dimension_numbers = #tpu.dot_dimension_numbers<[1], [0], [0], [1], [0, 0, 1, 1], [], []>} : vector<8x512xbf16>, vector<512x128xbf16>, vector<8x128xf32> -> vector<8x128xf32>
    %c0_9 = arith.constant 0 : index
    %c0_10 = arith.constant 0 : index
    %12 = vector.load %arg5[%c0_9, %c0_10] : memref<1x128xf32, #tpu.memory_space<vmem>>, vector<1x128xf32>
    %13 = vector.broadcast %12 : vector<1x128xf32> to vector<8x128xf32>
    %14 = arith.addf %11, %13 : vector<8x128xf32>
    %c0_11 = arith.constant 0 : index
    %c0_12 = arith.constant 0 : index
    %15 = vector.load %arg6[%c0_11, %c0_12] : memref<8x128xf32, #tpu.memory_space<vmem>>, vector<8x128xf32>
    tpu.vector_store %arg6[%c0_11, %c0_12], %14 {strides = array<i32>} : memref<8x128xf32, #tpu.memory_space<vmem>>, vector<8x128xf32>,
    return
  }
  func.func @transform_0(%arg0: i32) -> (i32, i32) {
    %c0_i32 = arith.constant 0 : i32
    %c0_i32_0 = arith.constant 0 : i32
    return %arg0, %c0_i32 : i32, i32
  }
  func.func @transform_1(%arg0: i32) -> (i32, i32) {
    %c0_i32 = arith.constant 0 : i32
    %c0_i32_0 = arith.constant 0 : i32
    %c0_i32_1 = arith.constant 0 : i32
    return %c0_i32, %c0_i32_0 : i32, i32
  }
  func.func @transform_2(%arg0: i32) -> (i32, i32) {
    %c0_i32 = arith.constant 0 : i32
    %c0_i32_0 = arith.constant 0 : i32
    %c0_i32_1 = arith.constant 0 : i32
    return %c0_i32, %c0_i32_0 : i32, i32
  }
  func.func @transform_3(%arg0: i32) -> (i32, i32) {
    %c0_i32 = arith.constant 0 : i32
    %c0_i32_0 = arith.constant 0 : i32
    %c0_i32_1 = arith.constant 0 : i32
    return %c0_i32, %c0_i32_0 : i32, i32
  }
  func.func @transform_4(%arg0: i32) -> (i32, i32) {
    %c0_i32 = arith.constant 0 : i32
    %c0_i32_0 = arith.constant 0 : i32
    %c0_i32_1 = arith.constant 0 : i32
    return %c0_i32, %c0_i32_0 : i32, i32
  }
  func.func @transform_5(%arg0: i32) -> (i32, i32) {
    %c0_i32 = arith.constant 0 : i32
    %c0_i32_0 = arith.constant 0 : i32
    return %arg0, %c0_i32 : i32, i32
  }
}

</mosaic_0001>

<llo_original>
// kernel: tpu_custom_call.1
$region0: #{tpu_custom_call.1}
  #allocation0 [shape = 'u32[]', space=smem, size = 0x4, offset = 0x4, fixed_abs, tag = 'smem constant byte address 0x4 - core index']
  #allocation1 [shape = 'u32[72,128]{1,0:T(1,128)}', space=vmem, size = 0x9000, scoped, tag = 'internal scratch']
  %s0 = inlined_call_operand.hbm [shape: f32[8,32], index: 0, kind: input, shape index: {}]
  %s1 = inlined_call_operand.hbm [shape: bf16[32,512], index: 1, kind: input, shape index: {}]
  %s2 = inlined_call_operand.hbm [shape: f32[1,512], index: 2, kind: input, shape index: {}]
  %s3 = inlined_call_operand.hbm [shape: bf16[512,128], index: 3, kind: input, shape index: {}]
  %s4 = inlined_call_operand.vmem [shape: f32[1,128], index: 4, kind: input, shape index: {}]
  %s5 = inlined_call_operand.hbm [shape: f32[8,128], index: 5, kind: output, shape index: {}]
  %s6 = sld [smem:[#allocation0]]
  $region46: #{tpu_custom_call.1} parent=0
    _
  %s8 = ssub.s32 1, %s6
  %s9 = scalar_select 0, %s8, %s6
  $region1: #{tpu_custom_call.1} parent=0
    #allocation2 [shape = 'u8[4096]{0}', space=vmem, size = 0x1000, scoped, tag = 'input window, operand 0, single buffered']
    #allocation3 [shape = 's32[1]{0}', space=sflag, size = 0x4, scoped, tag = 'scoped memory for tpu_custom_call.1']
    #allocation4 [shape = 's32[1]{0}', space=sflag, size = 0x4, scoped, tag = 'scoped memory for tpu_custom_call.1']
    #allocation5 [shape = 'u8[32768]{0}', space=vmem, size = 0x8000, scoped, tag = 'input window, operand 1, single buffered']
    #allocation6 [shape = 's32[1]{0}', space=sflag, size = 0x4, scoped, tag = 'scoped memory for tpu_custom_call.1']
    #allocation7 [shape = 'u8[2048]{0}', space=vmem, size = 0x800, scoped, tag = 'input window, operand 2, single buffered']
    #allocation8 [shape = 'u8[131072]{0}', space=vmem, size = 0x20000, scoped, tag = 'input window, operand 3, single buffered']
    #allocation9 [shape = 's32[1]{0}', space=sflag, size = 0x4, scoped, tag = 'scoped memory for tpu_custom_call.1']
    #allocation10 [shape = 'u8[4096]{0}', space=vmem, size = 0x1000, scoped, tag = 'output window, operand 0, single buffered']
    %10 = vsyncpa [#allocation3], 0
    %11 = vsyncpa [#allocation6], 0
    %12 = vsyncpa [#allocation9], 0
    %13 = vsyncpa [#allocation4], 0
    // Predicated region
    $region2: #{tpu_custom_call.1} parent=1 // pred_check
      _
    $region3: #{tpu_custom_call.1} parent=1 // pred_check_branch
      %15 = sbr.rel (0) target = $region5
    $region4: #{tpu_custom_call.1} parent=1 // pred_region
      %17 = vsyncadd [#allocation3], 0
      %s19 = sshll.u32 %s0, 4
      %s20 = int_to_ptr.hbm [resolvable:$true] %s19
      %s21 = sshll.u32 [#allocation2], 4
      %s22 = int_to_ptr.vmem [resolvable:$true] %s21
      %24 = dma.hbm_to_vmem [thread:$0]  %s20, 128, %s22, [#allocation3]
    $region5: #{tpu_custom_call.1} parent=1 // pred_fallthru
      _
    // Predicated region
    $region6: #{tpu_custom_call.1} parent=1 // pred_check
      _
    $region7: #{tpu_custom_call.1} parent=1 // pred_check_branch
      %26 = sbr.rel (0) target = $region9
    $region8: #{tpu_custom_call.1} parent=1 // pred_region
      %28 = vsyncadd [#allocation6], 0
      %s29 = sshll.u32 %s1, 4
      %s30 = int_to_ptr.hbm [resolvable:$true] %s29
      %s31 = sshll.u32 [#allocation5], 4
      %s32 = int_to_ptr.vmem [resolvable:$true] %s31
      %37 = dma.hbm_to_vmem [thread:$0]  %s30, 1024, %s32, [#allocation6], 256, 256, 16
    $region9: #{tpu_custom_call.1} parent=1 // pred_fallthru
      _
    // Predicated region
    $region10: #{tpu_custom_call.1} parent=1 // pred_check
      _
    $region11: #{tpu_custom_call.1} parent=1 // pred_check_branch
      %39 = sbr.rel (0) target = $region13
    $region12: #{tpu_custom_call.1} parent=1 // pred_region
      %41 = vsyncadd [#allocation6], 0
      %s43 = sshll.u32 %s2, 4
      %s44 = int_to_ptr.hbm [resolvable:$true] %s43
      %s45 = sshll.u32 [#allocation7], 4
      %s46 = int_to_ptr.vmem [resolvable:$true] %s45
      %48 = dma.hbm_to_vmem [thread:$0]  %s44, 64, %s46, [#allocation6]
    $region13: #{tpu_custom_call.1} parent=1 // pred_fallthru
      _
    // Predicated region
    $region14: #{tpu_custom_call.1} parent=1 // pred_check
      _
    $region15: #{tpu_custom_call.1} parent=1 // pred_check_branch
      %50 = sbr.rel (0) target = $region17
    $region16: #{tpu_custom_call.1} parent=1 // pred_region
      %52 = vsyncadd [#allocation9], 0
      %s53 = sshll.u32 %s3, 4
      %s54 = int_to_ptr.hbm [resolvable:$true] %s53
      %s55 = sshll.u32 [#allocation8], 4
      %s56 = int_to_ptr.vmem [resolvable:$true] %s55
      %61 = dma.hbm_to_vmem [thread:$0]  %s54, 4096, %s56, [#allocation9], 64, 64, 4
    $region17: #{tpu_custom_call.1} parent=1 // pred_fallthru
      _
    // Predicated region
    $region18: #{tpu_custom_call.1} parent=1 // pred_check
      _
    $region19: #{tpu_custom_call.1} parent=1 // pred_check_branch
      %63 = sbr.rel (0) target = $region21
    $region20: #{tpu_custom_call.1} parent=1 // pred_region
      _
    $region21: #{tpu_custom_call.1} parent=1 // pred_fallthru
      _
    // Predicated region
    $region22: #{tpu_custom_call.1} parent=1 // pred_check
      _
    $region23: #{tpu_custom_call.1} parent=1 // pred_check_branch
      %65 = sbr.rel (0) target = $region25
    $region24: #{tpu_custom_call.1} parent=1 // pred_region
      %67 = dma.done [#allocation3], 128
    $region25: #{tpu_custom_call.1} parent=1 // pred_fallthru
      _
    // Predicated region
    $region26: #{tpu_custom_call.1} parent=1 // pred_check
      _
    $region27: #{tpu_custom_call.1} parent=1 // pred_check_branch
      %69 = sbr.rel (0) target = $region29
    $region28: #{tpu_custom_call.1} parent=1 // pred_region
      %71 = dma.done [#allocation6], 1024
    $region29: #{tpu_custom_call.1} parent=1 // pred_fallthru
      _
    // Predicated region
    $region30: #{tpu_custom_call.1} parent=1 // pred_check
      _
    $region31: #{tpu_custom_call.1} parent=1 // pred_check_branch
      %73 = sbr.rel (0) target = $region33
    $region32: #{tpu_custom_call.1} parent=1 // pred_region
      %75 = dma.done [#allocation6], 64
    $region33: #{tpu_custom_call.1} parent=1 // pred_fallthru
      _
    // Predicated region
    $region34: #{tpu_custom_call.1} parent=1 // pred_check
      _
    $region35: #{tpu_custom_call.1} parent=1 // pred_check_branch
      %77 = sbr.rel (0) target = $region37
    $region36: #{tpu_custom_call.1} parent=1 // pred_region
      %79 = dma.done [#allocation9], 4096
    $region37: #{tpu_custom_call.1} parent=1 // pred_fallthru
      _
    %v81 = vld [vmem:[#allocation2] sm:$0xff]
    %v82 = vpack.c.bf16 %v81, %v81
    %v83 = vld [vmem:[#allocation5] sm:$0xff]
    %v84 = vld [vmem:[#allocation5 + $0x8] sm:$0xff]
    %v85 = vld [vmem:[#allocation5 + $0x10] sm:$0xff]
    %v86 = vld [vmem:[#allocation5 + $0x18] sm:$0xff]
    %v87 = vld [vmem:[#allocation5 + $0x20] sm:$0xff]
    %v88 = vld [vmem:[#allocation5 + $0x28] sm:$0xff]
    %v89 = vld [vmem:[#allocation5 + $0x30] sm:$0xff]
    %v90 = vld [vmem:[#allocation5 + $0x38] sm:$0xff]
    %v91 = vld [vmem:[#allocation7] sm:$0xf]
    %v93 = vperm.slane %v91, 0
    %v94 = vperm.slane %v91, 1
    %v95 = vperm.slane %v91, 2
    %v96 = vperm.slane %v91, 3
    %v109 = vunpack.c.l.b16 %v83
    %v110 = vunpack.c.h.b16 %v83
    %v111 = vunpack.c.l.b16 %v84
    %v112 = vunpack.c.h.b16 %v84
    %v113 = vunpack.c.l.b16 %v85
    %v114 = vunpack.c.h.b16 %v85
    %v115 = vunpack.c.l.b16 %v86
    %v116 = vunpack.c.h.b16 %v86
    %v117 = vunpack.c.l.b16 %v87
    %v118 = vunpack.c.h.b16 %v87
    %v119 = vunpack.c.l.b16 %v88
    %v120 = vunpack.c.h.b16 %v88
    %v121 = vunpack.c.l.b16 %v89
    %v122 = vunpack.c.h.b16 %v89
    %v123 = vunpack.c.l.b16 %v90
    %v124 = vunpack.c.h.b16 %v90
    %v125 = vpack.c.b16 %v113, %v109
    %v126 = vpack.c.b16 %v114, %v110
    %v127 = vpack.c.b16 %v115, %v111
    %v128 = vpack.c.b16 %v116, %v112
    %v129 = vpack.c.b16 %v121, %v117
    %v130 = vpack.c.b16 %v122, %v118
    %v131 = vpack.c.b16 %v123, %v119
    %v132 = vpack.c.b16 %v124, %v120
    %vm141 = vcmask 261120
    %v143 = vsel %vm141, %v82, 0
    %145 = vmatpush.bf16.msra.mxu0 0
    %146 = vmatpush.bf16.msra.mxu0 0
    %147 = vmatpush.bf16.msra.mxu0 0
    %148 = vmatpush.bf16.msra.mxu0 0
    %149 = vmatpush.bf16.msra.mxu0 0
    %150 = vmatpush.bf16.msra.mxu0 0
    %151 = vmatpush.bf16.msra.mxu0 %v129
    %152 = vmatpush.bf16.msra.mxu0 %v125
    %153 = vmatmul.bf16.gmra.mxu0 %v143
    %v154 = vpop.f32.mrf.mxu0
    %v155 = vadd.f32 %v93, %v154
    %v156 = vpop.f32.mrf.mxu0
    %157 = vdwg.mxu0
    %158 = vmatpush.bf16.msra.mxu0 0
    %159 = vmatpush.bf16.msra.mxu0 0
    %160 = vmatpush.bf16.msra.mxu0 0
    %161 = vmatpush.bf16.msra.mxu0 0
    %162 = vmatpush.bf16.msra.mxu0 0
    %163 = vmatpush.bf16.msra.mxu0 0
    %164 = vmatpush.bf16.msra.mxu0 %v130
    %165 = vmatpush.bf16.msra.mxu0 %v126
    %166 = vmatmul.bf16.gmra.mxu0 %v143
    %v167 = vpop.f32.mrf.mxu0
    %v168 = vadd.f32 %v94, %v167
    %v169 = vpop.f32.mrf.mxu0
    %170 = vdwg.mxu0
    %171 = vmatpush.bf16.msra.mxu0 0
    %172 = vmatpush.bf16.msra.mxu0 0
    %173 = vmatpush.bf16.msra.mxu0 0
    %174 = vmatpush.bf16.msra.mxu0 0
    %175 = vmatpush.bf16.msra.mxu0 0
    %176 = vmatpush.bf16.msra.mxu0 0
    %177 = vmatpush.bf16.msra.mxu0 %v131
    %178 = vmatpush.bf16.msra.mxu0 %v127
    %179 = vmatmul.bf16.gmra.mxu0 %v143
    %v180 = vpop.f32.mrf.mxu0
    %v181 = vadd.f32 %v95, %v180
    %v182 = vpop.f32.mrf.mxu0
    %183 = vdwg.mxu0
    %184 = vmatpush.bf16.msra.mxu0 0
    %185 = vmatpush.bf16.msra.mxu0 0
    %186 = vmatpush.bf16.msra.mxu0 0
    %187 = vmatpush.bf16.msra.mxu0 0
    %188 = vmatpush.bf16.msra.mxu0 0
    %189 = vmatpush.bf16.msra.mxu0 0
    %190 = vmatpush.bf16.msra.mxu0 %v132
    %191 = vmatpush.bf16.msra.mxu0 %v128
    %192 = vmatmul.bf16.gmra.mxu0 %v143
    %v193 = vpop.f32.mrf.mxu0
    %v194 = vadd.f32 %v96, %v193
    %v195 = vpop.f32.mrf.mxu0
    %196 = vdwg.mxu0
    %v197 = vmax.f32 %v155, 0.0
    %v198 = vmax.f32 %v168, 0.0
    %v199 = vmax.f32 %v181, 0.0
    %v200 = vmax.f32 %v194, 0.0
    %v201 = vpack.c.bf16 %v197, %v197
    %v202 = vpack.c.bf16 %v198, %v198
    %v203 = vpack.c.bf16 %v199, %v199
    %v204 = vpack.c.bf16 %v200, %v200
    %v205 = vld [vmem:[#allocation8] sm:$0xf]
    %v206 = vld [vmem:[#allocation8 + $0x4] sm:$0xf]
    %v207 = vld [vmem:[#allocation8 + $0x8] sm:$0xf]
    %v208 = vld [vmem:[#allocation8 + $0xc] sm:$0xf]
    %v209 = vld [vmem:[#allocation8 + $0x10] sm:$0xf]
    %v210 = vld [vmem:[#allocation8 + $0x14] sm:$0xf]
    %v211 = vld [vmem:[#allocation8 + $0x18] sm:$0xf]
    %v212 = vld [vmem:[#allocation8 + $0x1c] sm:$0xf]
    %v213 = vld [vmem:[#allocation8 + $0x20] sm:$0xf]
    %v214 = vld [vmem:[#allocation8 + $0x24] sm:$0xf]
    %v215 = vld [vmem:[#allocation8 + $0x28] sm:$0xf]
    %v216 = vld [vmem:[#allocation8 + $0x2c] sm:$0xf]
    %v217 = vld [vmem:[#allocation8 + $0x30] sm:$0xf]
    %v218 = vld [vmem:[#allocation8 + $0x34] sm:$0xf]
    %v219 = vld [vmem:[#allocation8 + $0x38] sm:$0xf]
    %v220 = vld [vmem:[#allocation8 + $0x3c] sm:$0xf]
    %v221 = vld [vmem:[#allocation8 + $0x40] sm:$0xf]
    %v222 = vld [vmem:[#allocation8 + $0x44] sm:$0xf]
    %v223 = vld [vmem:[#allocation8 + $0x48] sm:$0xf]
    %v224 = vld [vmem:[#allocation8 + $0x4c] sm:$0xf]
    %v225 = vld [vmem:[#allocation8 + $0x50] sm:$0xf]
    %v226 = vld [vmem:[#allocation8 + $0x54] sm:$0xf]
    %v227 = vld [vmem:[#allocation8 + $0x58] sm:$0xf]
    %v228 = vld [vmem:[#allocation8 + $0x5c] sm:$0xf]
    %v229 = vld [vmem:[#allocation8 + $0x60] sm:$0xf]
    %v230 = vld [vmem:[#allocation8 + $0x64] sm:$0xf]
    %v231 = vld [vmem:[#allocation8 + $0x68] sm:$0xf]
    %v232 = vld [vmem:[#allocation8 + $0x6c] sm:$0xf]
    %v233 = vld [vmem:[#allocation8 + $0x70] sm:$0xf]
    %v234 = vld [vmem:[#allocation8 + $0x74] sm:$0xf]
    %v235 = vld [vmem:[#allocation8 + $0x78] sm:$0xf]
    %v236 = vld [vmem:[#allocation8 + $0x7c] sm:$0xf]
    %v237 = vld [vmem:[#allocation8 + $0x80] sm:$0xf]
    %v238 = vld [vmem:[#allocation8 + $0x84] sm:$0xf]
    %v239 = vld [vmem:[#allocation8 + $0x88] sm:$0xf]
    %v240 = vld [vmem:[#allocation8 + $0x8c] sm:$0xf]
    %v241 = vld [vmem:[#allocation8 + $0x90] sm:$0xf]
    %v242 = vld [vmem:[#allocation8 + $0x94] sm:$0xf]
    %v243 = vld [vmem:[#allocation8 + $0x98] sm:$0xf]
    %v244 = vld [vmem:[#allocation8 + $0x9c] sm:$0xf]
    %v245 = vld [vmem:[#allocation8 + $0xa0] sm:$0xf]
    %v246 = vld [vmem:[#allocation8 + $0xa4] sm:$0xf]
    %v247 = vld [vmem:[#allocation8 + $0xa8] sm:$0xf]
    %v248 = vld [vmem:[#allocation8 + $0xac] sm:$0xf]
    %v249 = vld [vmem:[#allocation8 + $0xb0] sm:$0xf]
    %v250 = vld [vmem:[#allocation8 + $0xb4] sm:$0xf]
    %v251 = vld [vmem:[#allocation8 + $0xb8] sm:$0xf]
    %v252 = vld [vmem:[#allocation8 + $0xbc] sm:$0xf]
    %v253 = vld [vmem:[#allocation8 + $0xc0] sm:$0xf]
    %v254 = vld [vmem:[#allocation8 + $0xc4] sm:$0xf]
    %v255 = vld [vmem:[#allocation8 + $0xc8] sm:$0xf]
    %v256 = vld [vmem:[#allocation8 + $0xcc] sm:$0xf]
    %v257 = vld [vmem:[#allocation8 + $0xd0] sm:$0xf]
    %v258 = vld [vmem:[#allocation8 + $0xd4] sm:$0xf]
    %v259 = vld [vmem:[#allocation8 + $0xd8] sm:$0xf]
    %v260 = vld [vmem:[#allocation8 + $0xdc] sm:$0xf]
    %v261 = vld [vmem:[#allocation8 + $0xe0] sm:$0xf]
    %v262 = vld [vmem:[#allocation8 + $0xe4] sm:$0xf]
    %v263 = vld [vmem:[#allocation8 + $0xe8] sm:$0xf]
    %v264 = vld [vmem:[#allocation8 + $0xec] sm:$0xf]
    %v265 = vld [vmem:[#allocation8 + $0xf0] sm:$0xf]
    %v266 = vld [vmem:[#allocation8 + $0xf4] sm:$0xf]
    %v267 = vld [vmem:[#allocation8 + $0xf8] sm:$0xf]
    %v268 = vld [vmem:[#allocation8 + $0xfc] sm:$0xf]
    %v269 = vld [vmem:[%s4] sm:$0x1]
    %v271 = vperm.slane %v269, 0
    %v337 = vunpack.c.l.b16 %v205
    %v338 = vunpack.c.l.b16 %v206
    %v339 = vunpack.c.l.b16 %v207
    %v340 = vunpack.c.l.b16 %v208
    %v341 = vunpack.c.l.b16 %v209
    %v342 = vunpack.c.l.b16 %v210
    %v343 = vunpack.c.l.b16 %v211
    %v344 = vunpack.c.l.b16 %v212
    %v345 = vunpack.c.l.b16 %v213
    %v346 = vunpack.c.l.b16 %v214
    %v347 = vunpack.c.l.b16 %v215
    %v348 = vunpack.c.l.b16 %v216
    %v349 = vunpack.c.l.b16 %v217
    %v350 = vunpack.c.l.b16 %v218
    %v351 = vunpack.c.l.b16 %v219
    %v352 = vunpack.c.l.b16 %v220
    %v353 = vunpack.c.l.b16 %v221
    %v354 = vunpack.c.l.b16 %v222
    %v355 = vunpack.c.l.b16 %v223
    %v356 = vunpack.c.l.b16 %v224
    %v357 = vunpack.c.l.b16 %v225
    %v358 = vunpack.c.l.b16 %v226
    %v359 = vunpack.c.l.b16 %v227
    %v360 = vunpack.c.l.b16 %v228
    %v361 = vunpack.c.l.b16 %v229
    %v362 = vunpack.c.l.b16 %v230
    %v363 = vunpack.c.l.b16 %v231
    %v364 = vunpack.c.l.b16 %v232
    %v365 = vunpack.c.l.b16 %v233
    %v366 = vunpack.c.l.b16 %v234
    %v367 = vunpack.c.l.b16 %v235
    %v368 = vunpack.c.l.b16 %v236
    %v369 = vunpack.c.l.b16 %v237
    %v370 = vunpack.c.l.b16 %v238
    %v371 = vunpack.c.l.b16 %v239
    %v372 = vunpack.c.l.b16 %v240
    %v373 = vunpack.c.l.b16 %v241
    %v374 = vunpack.c.l.b16 %v242
    %v375 = vunpack.c.l.b16 %v243
    %v376 = vunpack.c.l.b16 %v244
    %v377 = vunpack.c.l.b16 %v245
    %v378 = vunpack.c.l.b16 %v246
    %v379 = vunpack.c.l.b16 %v247
    %v380 = vunpack.c.l.b16 %v248
    %v381 = vunpack.c.l.b16 %v249
    %v382 = vunpack.c.l.b16 %v250
    %v383 = vunpack.c.l.b16 %v251
    %v384 = vunpack.c.l.b16 %v252
    %v385 = vunpack.c.l.b16 %v253
    %v386 = vunpack.c.l.b16 %v254
    %v387 = vunpack.c.l.b16 %v255
    %v388 = vunpack.c.l.b16 %v256
    %v389 = vunpack.c.l.b16 %v257
    %v390 = vunpack.c.l.b16 %v258
    %v391 = vunpack.c.l.b16 %v259
    %v392 = vunpack.c.l.b16 %v260
    %v393 = vunpack.c.l.b16 %v261
    %v394 = vunpack.c.l.b16 %v262
    %v395 = vunpack.c.l.b16 %v263
    %v396 = vunpack.c.l.b16 %v264
    %v397 = vunpack.c.l.b16 %v265
    %v398 = vunpack.c.l.b16 %v266
    %v399 = vunpack.c.l.b16 %v267
    %v400 = vunpack.c.l.b16 %v268
    %v401 = vpack.c.b16 %v338, %v337
    %v402 = vpack.c.b16 %v340, %v339
    %v403 = vpack.c.b16 %v342, %v341
    %v404 = vpack.c.b16 %v344, %v343
    %v405 = vpack.c.b16 %v346, %v345
    %v406 = vpack.c.b16 %v348, %v347
    %v407 = vpack.c.b16 %v350, %v349
    %v408 = vpack.c.b16 %v352, %v351
    %v409 = vpack.c.b16 %v354, %v353
    %v410 = vpack.c.b16 %v356, %v355
    %v411 = vpack.c.b16 %v358, %v357
    %v412 = vpack.c.b16 %v360, %v359
    %v413 = vpack.c.b16 %v362, %v361
    %v414 = vpack.c.b16 %v364, %v363
    %v415 = vpack.c.b16 %v366, %v365
    %v416 = vpack.c.b16 %v368, %v367
    %v417 = vpack.c.b16 %v370, %v369
    %v418 = vpack.c.b16 %v372, %v371
    %v419 = vpack.c.b16 %v374, %v373
    %v420 = vpack.c.b16 %v376, %v375
    %v421 = vpack.c.b16 %v378, %v377
    %v422 = vpack.c.b16 %v380, %v379
    %v423 = vpack.c.b16 %v382, %v381
    %v424 = vpack.c.b16 %v384, %v383
    %v425 = vpack.c.b16 %v386, %v385
    %v426 = vpack.c.b16 %v388, %v387
    %v427 = vpack.c.b16 %v390, %v389
    %v428 = vpack.c.b16 %v392, %v391
    %v429 = vpack.c.b16 %v394, %v393
    %v430 = vpack.c.b16 %v396, %v395
    %v431 = vpack.c.b16 %v398, %v397
    %v432 = vpack.c.b16 %v400, %v399
    %465 = vmatpush.bf16.msra.mxu0 %v408
    %466 = vmatpush.bf16.msra.mxu0 %v407
    %467 = vmatpush.bf16.msra.mxu0 %v406
    %468 = vmatpush.bf16.msra.mxu0 %v405
    %469 = vmatpush.bf16.msra.mxu0 %v404
    %470 = vmatpush.bf16.msra.mxu0 %v403
    %471 = vmatpush.bf16.msra.mxu0 %v402
    %472 = vmatpush.bf16.msra.mxu0 %v401
    %473 = vmatmul.bf16.gmra.mxu0 %v201
    %v474 = vpop.f32.mrf.mxu0
    %v475 = vadd.f32 %v271, %v474
    %v476 = vpop.f32.mrf.mxu0
    %477 = vdwg.mxu0
    %478 = vmatpush.bf16.msra.mxu0 %v416
    %479 = vmatpush.bf16.msra.mxu0 %v415
    %480 = vmatpush.bf16.msra.mxu0 %v414
    %481 = vmatpush.bf16.msra.mxu0 %v413
    %482 = vmatpush.bf16.msra.mxu0 %v412
    %483 = vmatpush.bf16.msra.mxu0 %v411
    %484 = vmatpush.bf16.msra.mxu0 %v410
    %485 = vmatpush.bf16.msra.mxu0 %v409
    %486 = vmatmul.bf16.gmra.mxu0 %v202
    %v487 = vpop.f32.mrf.mxu0
    %v488 = vadd.f32 %v475, %v487
    %v489 = vpop.f32.mrf.mxu0
    %490 = vdwg.mxu0
    %491 = vmatpush.bf16.msra.mxu0 %v424
    %492 = vmatpush.bf16.msra.mxu0 %v423
    %493 = vmatpush.bf16.msra.mxu0 %v422
    %494 = vmatpush.bf16.msra.mxu0 %v421
    %495 = vmatpush.bf16.msra.mxu0 %v420
    %496 = vmatpush.bf16.msra.mxu0 %v419
    %497 = vmatpush.bf16.msra.mxu0 %v418
    %498 = vmatpush.bf16.msra.mxu0 %v417
    %499 = vmatmul.bf16.gmra.mxu0 %v203
    %v500 = vpop.f32.mrf.mxu0
    %v501 = vadd.f32 %v488, %v500
    %v502 = vpop.f32.mrf.mxu0
    %503 = vdwg.mxu0
    %504 = vmatpush.bf16.msra.mxu0 %v432
    %505 = vmatpush.bf16.msra.mxu0 %v431
    %506 = vmatpush.bf16.msra.mxu0 %v430
    %507 = vmatpush.bf16.msra.mxu0 %v429
    %508 = vmatpush.bf16.msra.mxu0 %v428
    %509 = vmatpush.bf16.msra.mxu0 %v427
    %510 = vmatpush.bf16.msra.mxu0 %v426
    %511 = vmatpush.bf16.msra.mxu0 %v425
    %512 = vmatmul.bf16.gmra.mxu0 %v204
    %v513 = vpop.f32.mrf.mxu0
    %v514 = vadd.f32 %v501, %v513
    %v515 = vpop.f32.mrf.mxu0
    %516 = vdwg.mxu0
    %517 = vst [vmem:[#allocation10] sm:$0xff] %v514
    // Predicated region
    $region38: #{tpu_custom_call.1} parent=1 // pred_check
      _
    $region39: #{tpu_custom_call.1} parent=1 // pred_check_branch
      %519 = sbr.rel (0) target = $region41
    $region40: #{tpu_custom_call.1} parent=1 // pred_region
      %521 = vsyncadd [#allocation4], 0
      %s523 = sshll.u32 [#allocation10], 4
      %s524 = int_to_ptr.vmem [resolvable:$true] %s523
      %s525 = sshll.u32 %s5, 4
      %s526 = int_to_ptr.hbm [resolvable:$true] %s525
      %528 = dma.vmem_to_hbm [thread:$0]  %s524, 128, %s526, [#allocation4]
    $region41: #{tpu_custom_call.1} parent=1 // pred_fallthru
      _
    // Predicated region
    $region42: #{tpu_custom_call.1} parent=1 // pred_check
      _
    $region43: #{tpu_custom_call.1} parent=1 // pred_check_branch
      %530 = sbr.rel (0) target = $region45
    $region44: #{tpu_custom_call.1} parent=1 // pred_region
      %532 = dma.done [#allocation4], 128
    $region45: #{tpu_custom_call.1} parent=1 // pred_fallthru
      _
    %533 = vsyncpa [#allocation3], 1
    %534 = vsyncpa [#allocation6], 1
    %535 = vsyncpa [#allocation9], 1
    %536 = vsyncpa [#allocation4], 1

</llo_original>
